<compile_context>
chip_gen: v7x
topology: tpu7x:2x2x1
jax: 0.10.0
libtpu: 0.0.40
codegen_flags: <defaults>
</compile_context>

<pallas_src>
import functools

import jax
import jax.numpy as jnp
from jax.experimental import pallas as pl
from jax.experimental.pallas import tpu as pltpu


def _round_up(a, m):
    return (a + m - 1) // m * m


# -----------------------------------------------------------------------------
# Fused kernel.  Grid = (batch [parallel], m-tiles of conv output rows [arbitrary]).
#   per tile:  conv-as-matmul (bf16 in / f32 acc) + bias + ReLU
#              -> masked row-sum into per-batch f32 accumulator
#   last tile: mean -> Linear(128->32)+ReLU -> fused rot|trans head -> store (1,8)
# -----------------------------------------------------------------------------
def _camera_props_kernel(patches_ref, conv_w_ref, fc_w_ref, head_w_ref,
                         consts_ref, out_ref, acc_ref, *, tile_m, n_rows):
    m = pl.program_id(1)

    @pl.when(m == 0)
    def _init():
        acc_ref[...] = jnp.zeros_like(acc_ref)

    # conv lowered to matmul on this M tile: (tile_m, K) @ (K, 128).
    h = jnp.dot(patches_ref[0], conv_w_ref[...],
                preferred_element_type=jnp.float32)
    conv_b = consts_ref[0:1, :]                                   # (1, 128)
    h = jnp.maximum(h + conv_b, 0.0)

    # Mask zero-padded rows (global row index >= n_rows) and segment-sum the
    # tile's rows into the per-batch accumulator (cross-sublane reduce: XLU).
    row = jax.lax.broadcasted_iota(jnp.int32, h.shape, 0) + m * tile_m
    h = jnp.where(row < n_rows, h, 0.0)
    acc_ref[...] += jnp.sum(h, axis=0, keepdims=True)

    @pl.when(m == pl.num_programs(1) - 1)
    def _finalize():
        pooled = acc_ref[...] * (1.0 / n_rows)                    # (1, 128) mean
        fc_b = consts_ref[1:2, 0:32]                              # (1, 32)
        f = jnp.maximum(
            jnp.dot(pooled, fc_w_ref[...],
                    preferred_element_type=jnp.float32) + fc_b, 0.0)
        head_b = consts_ref[2:3, 0:8]                             # (1, 8)
        out = jnp.dot(f, head_w_ref[...],
                      preferred_element_type=jnp.float32) + head_b
        out_ref[...] = out.reshape(1, 1, 8)


# -----------------------------------------------------------------------------
# Glue: im2col, rotation-matrix assembly, parameter setup.
# -----------------------------------------------------------------------------
def _im2col_3x3_valid(x):
    """x: (B, C, H, W) -> patches (B, H'*W', C*9), K flattened as (c, ky, kx)."""
    B, C, H, W = x.shape
    Hp, Wp = H - 2, W - 2
    cols = []
    for ky in range(3):
        for kx in range(3):
            cols.append(x[:, :, ky:ky + Hp, kx:kx + Wp])          # (B, C, Hp, Wp)
    patches = jnp.stack(cols, axis=2)                             # (B, C, 9, Hp, Wp)
    patches = patches.reshape(B, C * 9, Hp * Wp)
    return jnp.transpose(patches, (0, 2, 1))                      # (B, P, K)


def rotation_tensor_jax(theta, phi, psi):
    """Mirror of the PyTorch rotation_tensor (Bx3x3 = Rz @ Ry @ Rx)."""
    # TODO(synk): the torch code passes r[:, i] with shape (B,) where
    # rotation_tensor expects (B,1,1); we reproduce the intended semantics by
    # reshaping to (B,1,1).
    b = theta.shape[0]
    one = jnp.ones((b, 1, 1), jnp.float32)
    zero = jnp.zeros((b, 1, 1), jnp.float32)
    th = theta.reshape(b, 1, 1)
    ph = phi.reshape(b, 1, 1)
    ps = psi.reshape(b, 1, 1)
    rot_x = jnp.concatenate([
        jnp.concatenate([one, zero, zero], axis=1),
        jnp.concatenate([zero, jnp.cos(th), jnp.sin(th)], axis=1),
        jnp.concatenate([zero, -jnp.sin(th), jnp.cos(th)], axis=1)], axis=2)
    rot_y = jnp.concatenate([
        jnp.concatenate([jnp.cos(ph), zero, -jnp.sin(ph)], axis=1),
        jnp.concatenate([zero, one, zero], axis=1),
        jnp.concatenate([jnp.sin(ph), zero, jnp.cos(ph)], axis=1)], axis=2)
    rot_z = jnp.concatenate([
        jnp.concatenate([jnp.cos(ps), -jnp.sin(ps), zero], axis=1),
        jnp.concatenate([jnp.sin(ps), jnp.cos(ps), zero], axis=1),
        jnp.concatenate([zero, zero, one], axis=1)], axis=2)
    return jnp.einsum('bij,bjk->bik', rot_z,
                      jnp.einsum('bij,bjk->bik', rot_y, rot_x))


def init_params(channels, key):
    ks = jax.random.split(key, 8)
    s = 0.1
    return {
        "conv_w_oihw": jax.random.normal(ks[0], (128, channels, 3, 3), jnp.float32) * s,
        "conv_b": jax.random.normal(ks[1], (128,), jnp.float32) * s,
        "fc_w": jax.random.normal(ks[2], (128, 32), jnp.float32) * s,   # (in, out)
        "fc_b": jax.random.normal(ks[3], (32,), jnp.float32) * s,
        "rot_w": jax.random.normal(ks[4], (32, 3), jnp.float32) * s,
        "rot_b": jax.random.normal(ks[5], (3,), jnp.float32) * s,
        "trans_w": jax.random.normal(ks[6], (32, 3), jnp.float32) * s,
        "trans_b": jax.random.normal(ks[7], (3,), jnp.float32) * s,
    }


@jax.jit
def camera_props_forward(x, params):
    """x: (B, C, H, W) float32 -> (R: (B,3,3), t: (B,3,1,1))."""
    B, C, H, W = x.shape
    Hp, Wp = H - 2, W - 2
    P = Hp * Wp
    K = C * 9

    # M tile: multiple of 8 (256-aligned once large enough for the 256-tall
    # v7x MXU); capped so double-buffered tiles fit every generation's VMEM.
    TILE_M = min(2048, _round_up(P, 8))
    P_pad = _round_up(P, TILE_M)
    num_m = P_pad // TILE_M

    # TODO(synk): for large H,W build the patch rows inside the kernel from
    # the raw input (shifted static slices in VMEM) instead of materializing
    # the 9x-inflated im2col array in HBM.
    patches = _im2col_3x3_valid(x)                                  # (B, P, K)
    patches = jnp.pad(patches, ((0, 0), (0, P_pad - P), (0, 0)))
    patches = patches.astype(jnp.bfloat16)                         # (B, P_pad, K)

    conv_w = params["conv_w_oihw"].reshape(128, K).T.astype(jnp.bfloat16)  # (K,128)
    fc_w = params["fc_w"]                                           # (128, 32)

    # Fused rot|trans head: cols 0..2 = rot, 3..5 = trans, 6..7 = zero pad.
    head_w = jnp.pad(
        jnp.concatenate([params["rot_w"], params["trans_w"]], axis=1),
        ((0, 0), (0, 2)))                                           # (32, 8)

    # Packed lane-dense constants: row0 conv_b(128), row1 fc_b(32), row2 head_b(6).
    consts = jnp.zeros((3, 128), jnp.float32)
    consts = consts.at[0, :].set(params["conv_b"])
    consts = consts.at[1, :32].set(params["fc_b"])
    consts = consts.at[2, :6].set(
        jnp.concatenate([params["rot_b"], params["trans_b"]]))

    # VMEM budget: double-buffered bf16 patch tile + f32 conv/ReLU intermediate
    # + params/accumulators, with 2x headroom (floor 16 MiB, cap 64 MiB).
    vmem_bytes = (2 * TILE_M * K * 2
                  + 2 * TILE_M * 128 * 4
                  + 4 * 128 * 128 * 4)
    vmem_limit = int(min(64 << 20, max(16 << 20, 2 * vmem_bytes)))

    kernel = functools.partial(_camera_props_kernel, tile_m=TILE_M, n_rows=P)

    out = pl.pallas_call(
        kernel,
        out_shape=jax.ShapeDtypeStruct((B, 1, 8), jnp.float32),
        grid_spec=pltpu.PrefetchScalarGridSpec(
            num_scalar_prefetch=0,
            grid=(B, num_m),
            in_specs=[
                pl.BlockSpec((1, TILE_M, K), lambda b, m: (b, m, 0)),  # patches bf16
                pl.BlockSpec((K, 128), lambda b, m: (0, 0)),           # conv_w bf16
                pl.BlockSpec((128, 32), lambda b, m: (0, 0)),          # fc_w
                pl.BlockSpec((32, 8), lambda b, m: (0, 0)),            # fused head_w
                pl.BlockSpec((3, 128), lambda b, m: (0, 0)),           # packed biases
            ],
            out_specs=pl.BlockSpec((1, 1, 8), lambda b, m: (b, 0, 0)),
            scratch_shapes=[pltpu.VMEM((1, 128), jnp.float32)],        # pooled acc
        ),
        compiler_params=pltpu.CompilerParams(
            dimension_semantics=("parallel", "arbitrary"),
            vmem_limit_bytes=vmem_limit),
    )(patches, conv_w, fc_w, head_w, consts)

    out = out[:, 0, :]                                              # (B, 8)
    r = out[:, 0:3]
    t = out[:, 3:6]
    R = rotation_tensor_jax(r[:, 0], r[:, 1], r[:, 2])              # (B, 3, 3)
    return R, t.reshape(B, 3, 1, 1)


# -----------------------------------------------------------------------------
# Pure-JAX references for checking: one matching the bf16 conv cast (tight
# tolerance) and one fully f32 (looser tolerance, independent of the cast).
# -----------------------------------------------------------------------------
def reference_forward(x, params, conv_dtype=jnp.bfloat16):
    B = x.shape[0]
    h = jax.lax.conv_general_dilated(
        x.astype(conv_dtype),
        params["conv_w_oihw"].astype(conv_dtype),
        window_strides=(1, 1), padding="VALID",
        dimension_numbers=("NCHW", "OIHW", "NCHW"),
        preferred_element_type=jnp.float32)
    h = jnp.maximum(h + params["conv_b"].reshape(1, 128, 1, 1), 0.0)
    pooled = jnp.mean(jnp.mean(h, axis=2), axis=2)                   # (B, 128)
    f = jnp.maximum(pooled @ params["fc_w"] + params["fc_b"], 0.0)
    r = f @ params["rot_w"] + params["rot_b"]
    t = f @ params["trans_w"] + params["trans_b"]
    R = rotation_tensor_jax(r[:, 0], r[:, 1], r[:, 2])
    return R, t.reshape(B, 3, 1, 1)


if __name__ == "__main__":
    B, C, H, W = 2, 4, 16, 16
    root = jax.random.PRNGKey(0)
    kx, kp = jax.random.split(root)
    x = jax.random.normal(kx, (B, C, H, W), jnp.float32)
    params = init_params(C, kp)

    R, t = camera_props_forward(x, params)
    jax.block_until_ready((R, t))

    assert R.shape == (B, 3, 3) and t.shape == (B, 3, 1, 1)

    R_ref, t_ref = reference_forward(x, params, conv_dtype=jnp.bfloat16)
    assert bool(jnp.allclose(R, R_ref, rtol=1e-3, atol=1e-3)), "R mismatch (bf16 ref)"
    assert bool(jnp.allclose(t, t_ref, rtol=1e-3, atol=1e-3)), "t mismatch (bf16 ref)"

    R_f32, t_f32 = reference_forward(x, params, conv_dtype=jnp.float32)
    assert bool(jnp.allclose(R, R_f32, rtol=2e-2, atol=2e-2)), "R mismatch (f32 ref)"
    assert bool(jnp.allclose(t, t_f32, rtol=2e-2, atol=2e-2)), "t mismatch (f32 ref)"

    print("KERNEL_OK")
</pallas_src>

<mosaic_0001>
module attributes {stable_mosaic.version = 11 : i64} {
  func.func @_camera_props_kernel(%arg0: i32, %arg1: i32, %arg2: memref<1x200x36xbf16, #tpu.memory_space<vmem>>, %arg3: memref<36x128xbf16, #tpu.memory_space<vmem>>, %arg4: memref<128x32xf32, #tpu.memory_space<vmem>>, %arg5: memref<32x8xf32, #tpu.memory_space<vmem>>, %arg6: memref<3x128xf32, #tpu.memory_space<vmem>>, %arg7: memref<1x1x8xf32, #tpu.memory_space<vmem>>, %arg8: memref<1x128xf32, #tpu.memory_space<vmem>>) attributes {dimension_semantics = [#tpu.dimension_semantics<parallel>, #tpu.dimension_semantics<arbitrary>], iteration_bounds = array<i64: 2, 1>, scalar_prefetch = 0 : i64, scratch_operands = 1 : i64, tpu.core_type = #tpu.core_type<tc>, window_params = [{transform_indices = @transform_0, window_bounds = array<i64: 1, 200, 36>}, {pipeline_mode = #tpu.pipeline_mode<synchronous>, transform_indices = @transform_1, window_bounds = array<i64: 36, 128>}, {pipeline_mode = #tpu.pipeline_mode<synchronous>, transform_indices = @transform_2, window_bounds = array<i64: 128, 32>}, {pipeline_mode = #tpu.pipeline_mode<synchronous>, transform_indices = @transform_3, window_bounds = array<i64: 32, 8>}, {pipeline_mode = #tpu.pipeline_mode<synchronous>, transform_indices = @transform_4, window_bounds = array<i64: 3, 128>}, {transform_indices = @transform_5, window_bounds = array<i64: 1, 1, 8>}]} {
    %c0_i32 = arith.constant 0 : i32
    %0 = arith.cmpi eq, %arg1, %c0_i32 : i32
    %1 = arith.extui %0 : i1 to i32
    %c0_i32_0 = arith.constant 0 : i32
    %2 = arith.cmpi ne, %1, %c0_i32_0 : i32
    scf.if %2 {
      %cst_16 = arith.constant 0.000000e+00 : f32
      %28 = vector.broadcast %cst_16 : f32 to vector<1x128xf32>
      %c0_17 = arith.constant 0 : index
      %c0_18 = arith.constant 0 : index
      %29 = vector.load %arg8[%c0_17, %c0_18] : memref<1x128xf32, #tpu.memory_space<vmem>>, vector<1x128xf32>
      tpu.vector_store %arg8[%c0_17, %c0_18], %28 {strides = array<i32>} : memref<1x128xf32, #tpu.memory_space<vmem>>, vector<1x128xf32>,
    } else {
    }
    %c0 = arith.constant 0 : index
    %c0_1 = arith.constant 0 : index
    %c0_2 = arith.constant 0 : index
    %3 = vector.load %arg2[%c0, %c0_1, %c0_2] : memref<1x200x36xbf16, #tpu.memory_space<vmem>>, vector<1x200x36xbf16>
    %4 = vector.shape_cast %3 : vector<1x200x36xbf16> to vector<200x36xbf16>
    %c0_3 = arith.constant 0 : index
    %c0_4 = arith.constant 0 : index
    %5 = vector.load %arg3[%c0_3, %c0_4] : memref<36x128xbf16, #tpu.memory_space<vmem>>, vector<36x128xbf16>
    %cst = arith.constant dense<0.000000e+00> : vector<200x128xf32>
    %6 = tpu.matmul %4, %5, %cst {dimension_numbers = #tpu.dot_dimension_numbers<[1], [0], [0], [1], [0, 0, 1, 1], [], []>} : vector<200x36xbf16>, vector<36x128xbf16>, vector<200x128xf32> -> vector<200x128xf32>
    %c0_5 = arith.constant 0 : index
    %c0_6 = arith.constant 0 : index
    %7 = vector.load %arg6[%c0_5, %c0_6] : memref<3x128xf32, #tpu.memory_space<vmem>>, vector<1x128xf32>
    %8 = vector.broadcast %7 : vector<1x128xf32> to vector<200x128xf32>
    %9 = arith.addf %6, %8 : vector<200x128xf32>
    %cst_7 = arith.constant 0.000000e+00 : f32
    %10 = vector.broadcast %cst_7 : f32 to vector<200x128xf32>
    %11 = arith.maximumf %9, %10 : vector<200x128xf32>
    %12 = tpu.iota {dimensions = array<i32: 0>} : vector<200x128xi32>
    %c200_i32 = arith.constant 200 : i32
    %13 = arith.muli %arg1, %c200_i32 : i32
    %14 = vector.broadcast %13 : i32 to vector<200x128xi32>
    %15 = arith.addi %12, %14 : vector<200x128xi32>
    %c196_i32 = arith.constant 196 : i32
    %16 = vector.broadcast %c196_i32 : i32 to vector<200x128xi32>
    %17 = arith.cmpi slt, %15, %16 : vector<200x128xi32>
    %cst_8 = arith.constant 0.000000e+00 : f32
    %18 = vector.broadcast %cst_8 : f32 to vector<200x128xf32>
    %19 = arith.select %17, %11, %18 : vector<200x128xi1>, vector<200x128xf32>
    %c0_9 = arith.constant 0 : index
    %c0_10 = arith.constant 0 : index
    %20 = vector.load %arg8[%c0_9, %c0_10] : memref<1x128xf32, #tpu.memory_space<vmem>>, vector<1x128xf32>
    %cst_11 = arith.constant dense<0.000000e+00> : vector<128xf32>
    %21 = vector.multi_reduction <add>, %19, %cst_11 [0] : vector<200x128xf32> to vector<128xf32>
    %22 = vector.shape_cast %21 : vector<128xf32> to vector<1x128xf32>
    %23 = arith.addf %20, %22 : vector<1x128xf32>
    %c0_12 = arith.constant 0 : index
    %c0_13 = arith.constant 0 : index
    %24 = vector.load %arg8[%c0_12, %c0_13] : memref<1x128xf32, #tpu.memory_space<vmem>>, vector<1x128xf32>
    tpu.vector_store %arg8[%c0_12, %c0_13], %23 {strides = array<i32>} : memref<1x128xf32, #tpu.memory_space<vmem>>, vector<1x128xf32>,
    %c0_i32_14 = arith.constant 0 : i32
    %25 = arith.cmpi eq, %arg1, %c0_i32_14 : i32
    %26 = arith.extui %25 : i1 to i32
    %c0_i32_15 = arith.constant 0 : i32
    %27 = arith.cmpi ne, %26, %c0_i32_15 : i32
    scf.if %27 {
      %c0_16 = arith.constant 0 : index
      %c0_17 = arith.constant 0 : index
      %28 = vector.load %arg8[%c0_16, %c0_17] : memref<1x128xf32, #tpu.memory_space<vmem>>, vector<1x128xf32>
      %cst_18 = arith.constant 0.00510204071 : f32
      %29 = vector.broadcast %cst_18 : f32 to vector<1x128xf32>
      %30 = arith.mulf %28, %29 : vector<1x128xf32>
      %c1 = arith.constant 1 : index
      %c0_19 = arith.constant 0 : index
      %31 = vector.load %arg6[%c1, %c0_19] : memref<3x128xf32, #tpu.memory_space<vmem>>, vector<1x32xf32>
      %c0_20 = arith.constant 0 : index
      %c0_21 = arith.constant 0 : index
      %32 = vector.load %arg4[%c0_20, %c0_21] : memref<128x32xf32, #tpu.memory_space<vmem>>, vector<128x32xf32>
      %cst_22 = arith.constant dense<0.000000e+00> : vector<1x32xf32>
      %33 = tpu.matmul %30, %32, %cst_22 {dimension_numbers = #tpu.dot_dimension_numbers<[1], [0], [0], [1], [0, 0, 1, 1], [], []>} : vector<1x128xf32>, vector<128x32xf32>, vector<1x32xf32> -> vector<1x32xf32>
      %34 = arith.addf %33, %31 : vector<1x32xf32>
      %cst_23 = arith.constant 0.000000e+00 : f32
      %35 = vector.broadcast %cst_23 : f32 to vector<1x32xf32>
      %36 = arith.maximumf %34, %35 : vector<1x32xf32>
      %c2 = arith.constant 2 : index
      %c0_24 = arith.constant 0 : index
      %37 = vector.load %arg6[%c2, %c0_24] : memref<3x128xf32, #tpu.memory_space<vmem>>, vector<1x8xf32>
      %c0_25 = arith.constant 0 : index
      %c0_26 = arith.constant 0 : index
      %38 = vector.load %arg5[%c0_25, %c0_26] : memref<32x8xf32, #tpu.memory_space<vmem>>, vector<32x8xf32>
      %cst_27 = arith.constant dense<0.000000e+00> : vector<1x8xf32>
      %39 = tpu.matmul %36, %38, %cst_27 {dimension_numbers = #tpu.dot_dimension_numbers<[1], [0], [0], [1], [0, 0, 1, 1], [], []>} : vector<1x32xf32>, vector<32x8xf32>, vector<1x8xf32> -> vector<1x8xf32>
      %40 = arith.addf %39, %37 : vector<1x8xf32>
      %41 = vector.shape_cast %40 : vector<1x8xf32> to vector<1x1x8xf32>
      %c0_28 = arith.constant 0 : index
      %c0_29 = arith.constant 0 : index
      %c0_30 = arith.constant 0 : index
      %42 = vector.load %arg7[%c0_28, %c0_29, %c0_30] : memref<1x1x8xf32, #tpu.memory_space<vmem>>, vector<1x1x8xf32>
      tpu.vector_store %arg7[%c0_28, %c0_29, %c0_30], %41 {strides = array<i32>} : memref<1x1x8xf32, #tpu.memory_space<vmem>>, vector<1x1x8xf32>,
    } else {
    }
    return
  }
  func.func @transform_0(%arg0: i32, %arg1: i32) -> (i32, i32, i32) {
    %c0_i32 = arith.constant 0 : i32
    %c0_i32_0 = arith.constant 0 : i32
    return %arg0, %arg1, %c0_i32 : i32, i32, i32
  }
  func.func @transform_1(%arg0: i32, %arg1: i32) -> (i32, i32) {
    %c0_i32 = arith.constant 0 : i32
    %c0_i32_0 = arith.constant 0 : i32
    %c0_i32_1 = arith.constant 0 : i32
    return %c0_i32, %c0_i32_0 : i32, i32
  }
  func.func @transform_2(%arg0: i32, %arg1: i32) -> (i32, i32) {
    %c0_i32 = arith.constant 0 : i32
    %c0_i32_0 = arith.constant 0 : i32
    %c0_i32_1 = arith.constant 0 : i32
    return %c0_i32, %c0_i32_0 : i32, i32
  }
  func.func @transform_3(%arg0: i32, %arg1: i32) -> (i32, i32) {
    %c0_i32 = arith.constant 0 : i32
    %c0_i32_0 = arith.constant 0 : i32
    %c0_i32_1 = arith.constant 0 : i32
    return %c0_i32, %c0_i32_0 : i32, i32
  }
  func.func @transform_4(%arg0: i32, %arg1: i32) -> (i32, i32) {
    %c0_i32 = arith.constant 0 : i32
    %c0_i32_0 = arith.constant 0 : i32
    %c0_i32_1 = arith.constant 0 : i32
    return %c0_i32, %c0_i32_0 : i32, i32
  }
  func.func @transform_5(%arg0: i32, %arg1: i32) -> (i32, i32, i32) {
    %c0_i32 = arith.constant 0 : i32
    %c0_i32_0 = arith.constant 0 : i32
    %c0_i32_1 = arith.constant 0 : i32
    return %arg0, %c0_i32, %c0_i32_0 : i32, i32, i32
  }
}

</mosaic_0001>

<llo_original>
// kernel: camera_props_forward.1
$region0: #{camera_props_forward.1}
  #allocation0 [shape = 'u32[]', space=smem, size = 0x4, offset = 0x4, fixed_abs, tag = 'smem constant byte address 0x4 - core index']
  #allocation1 [shape = 'u32[144,128]{1,0:T(1,128)}', space=vmem, size = 0x12000, scoped, tag = 'internal scratch']
  #allocation2 [shape = 'f32[1,128]{1,0:T(1,128)}', space=vmem, size = 0x200, scoped, tag = 'scratch operand']
  %s0 = inlined_call_operand.vmem [shape: bf16[2,200,36], index: 0, kind: input, shape index: {}]
  %s1 = inlined_call_operand.vmem [shape: bf16[36,128], index: 1, kind: input, shape index: {}]
  %s2 = inlined_call_operand.vmem [shape: f32[128,32], index: 2, kind: input, shape index: {}]
  %s3 = inlined_call_operand.vmem [shape: f32[32,8], index: 3, kind: input, shape index: {}]
  %s4 = inlined_call_operand.vmem [shape: f32[3,128], index: 4, kind: input, shape index: {}]
  %s5 = inlined_call_operand.vmem [shape: f32[2,1,8], index: 5, kind: output, shape index: {}]
  %s6 = sld [smem:[#allocation0]]
  $region61: #{camera_props_forward.1} parent=0
    _
  %s8 = ssub.s32 1, %s6
  %s9 = scalar_select 0, %s8, %s6
  loop: start=0, step=1, limit=4
  $region2: #{camera_props_forward.1} parent=0 // loop_pre_header
    _
  $region3: #{camera_props_forward.1} parent=0 // loop_header
    %s11 = sphi 0, %s15
    %p12 = scmp.ge.s32.totalorder %s11, 4
    %s18 = sphi 0, %s30
    %s19 = sphi 0, %s26
    %s20 = sphi 0, %s18
    %s21 = sphi 0, %s19
    %s22 = sphi 0, %s20
    %s23 = sphi 0, %s21
    %s35 = sphi 0, %s37
    %s38 = sphi 0, %s35
    %s39 = sphi 0, %s38
    %s55 = sphi 0, %s39
    %s59 = sphi 0, %s59
    %s61 = sphi 0, %s59
    %s62 = sphi 0, %s61
    %s76 = sphi 0, %s62
    %s80 = sphi 0, %s80
    %s82 = sphi 0, %s80
    %s83 = sphi 0, %s82
    %s97 = sphi 0, %s83
    %s101 = sphi 0, %s101
    %s103 = sphi 0, %s101
    %s104 = sphi 0, %s103
    %s118 = sphi 0, %s104
    %s122 = sphi 0, %s122
    %s124 = sphi 0, %s122
    %s125 = sphi 0, %s124
    %s139 = sphi 0, %s125
    %s145 = sphi 0, %s147
    %s148 = sphi 0, %s145
    %s149 = sphi 0, %s148
    %s165 = sphi 0, %s149
  $region4: #{camera_props_forward.1} parent=0 // loop_header_branch
    %14 = sbr.rel (%p12) target = $region8
  $region5: #{camera_props_forward.1} parent=0 // loop_body
    %s16 = ssub.s32 %s11, 1
    %s17 = ssub.s32 %s11, 2
    %s24 = sadd.s32 1, %s19
    %p25 = scmp.ge.s32.totalorder %s24, 1
    %s26 = scalar_select %p25, 0, %s24
    %s27 = sadd.s32 1, %s18
    %s28 = scalar_select %p25, %s27, %s18
    %p29 = scmp.ge.s32.totalorder %s28, 2
    %s30 = scalar_select %p29, 0, %s28
    %s31 = ssub.s32 %s18, %s30
    %s32 = ssub.s32 %s19, %s26
    %s33 = sor.u32 %s31, %s32
    %p34 = scmp.eq.s32.totalorder %s33, 0
    %s36 = sadd.s32 %s35, 1
    %s37 = scalar_select %p34, %s35, %s36
    %p40 = pneg %p34
    %p41 = scmp.eq.s32.totalorder %s11, 1
    %p42 = por %p40, %p41
    %p43 = scmp.ne.s32.totalorder %s35, %s38
    %p44 = scmp.eq.s32.totalorder %s11, 0
    %p45 = por %p43, %p44
    %p46 = scmp.ne.s32.totalorder %s35, %s38
    %p47 = scmp.eq.s32.totalorder %s16, 1
    %p48 = por %p46, %p47
    %p49 = scmp.ne.s32.totalorder %s38, %s39
    %p50 = scmp.eq.s32.totalorder %s16, 0
    %p51 = por %p49, %p50
    %p52 = scmp.ne.s32.totalorder %s38, %s39
    %p53 = scmp.eq.s32.totalorder %s17, 1
    %p54 = por %p52, %p53
    %p56 = scmp.ne.s32.totalorder %s39, %s55
    %p57 = scmp.eq.s32.totalorder %s17, 0
    %p58 = por %p56, %p57
    %s60 = sadd.s32 %s59, 1
    %p63 = scmp.eq.s32.totalorder %s11, 1
    %p64 = scmp.ne.s32.totalorder %s59, %s61
    %p65 = scmp.eq.s32.totalorder %s11, 0
    %p66 = por %p64, %p65
    %p67 = scmp.ne.s32.totalorder %s59, %s61
    %p68 = scmp.eq.s32.totalorder %s16, 1
    %p69 = por %p67, %p68
    %p70 = scmp.ne.s32.totalorder %s61, %s62
    %p71 = scmp.eq.s32.totalorder %s16, 0
    %p72 = por %p70, %p71
    %p73 = scmp.ne.s32.totalorder %s61, %s62
    %p74 = scmp.eq.s32.totalorder %s17, 1
    %p75 = por %p73, %p74
    %p77 = scmp.ne.s32.totalorder %s62, %s76
    %p78 = scmp.eq.s32.totalorder %s17, 0
    %p79 = por %p77, %p78
    %s81 = sadd.s32 %s80, 1
    %p84 = scmp.eq.s32.totalorder %s11, 1
    %p85 = scmp.ne.s32.totalorder %s80, %s82
    %p86 = scmp.eq.s32.totalorder %s11, 0
    %p87 = por %p85, %p86
    %p88 = scmp.ne.s32.totalorder %s80, %s82
    %p89 = scmp.eq.s32.totalorder %s16, 1
    %p90 = por %p88, %p89
    %p91 = scmp.ne.s32.totalorder %s82, %s83
    %p92 = scmp.eq.s32.totalorder %s16, 0
    %p93 = por %p91, %p92
    %p94 = scmp.ne.s32.totalorder %s82, %s83
    %p95 = scmp.eq.s32.totalorder %s17, 1
    %p96 = por %p94, %p95
    %p98 = scmp.ne.s32.totalorder %s83, %s97
    %p99 = scmp.eq.s32.totalorder %s17, 0
    %p100 = por %p98, %p99
    %s102 = sadd.s32 %s101, 1
    %p105 = scmp.eq.s32.totalorder %s11, 1
    %p106 = scmp.ne.s32.totalorder %s101, %s103
    %p107 = scmp.eq.s32.totalorder %s11, 0
    %p108 = por %p106, %p107
    %p109 = scmp.ne.s32.totalorder %s101, %s103
    %p110 = scmp.eq.s32.totalorder %s16, 1
    %p111 = por %p109, %p110
    %p112 = scmp.ne.s32.totalorder %s103, %s104
    %p113 = scmp.eq.s32.totalorder %s16, 0
    %p114 = por %p112, %p113
    %p115 = scmp.ne.s32.totalorder %s103, %s104
    %p116 = scmp.eq.s32.totalorder %s17, 1
    %p117 = por %p115, %p116
    %p119 = scmp.ne.s32.totalorder %s104, %s118
    %p120 = scmp.eq.s32.totalorder %s17, 0
    %p121 = por %p119, %p120
    %s123 = sadd.s32 %s122, 1
    %p126 = scmp.eq.s32.totalorder %s11, 1
    %p127 = scmp.ne.s32.totalorder %s122, %s124
    %p128 = scmp.eq.s32.totalorder %s11, 0
    %p129 = por %p127, %p128
    %p130 = scmp.ne.s32.totalorder %s122, %s124
    %p131 = scmp.eq.s32.totalorder %s16, 1
    %p132 = por %p130, %p131
    %p133 = scmp.ne.s32.totalorder %s124, %s125
    %p134 = scmp.eq.s32.totalorder %s16, 0
    %p135 = por %p133, %p134
    %p136 = scmp.ne.s32.totalorder %s124, %s125
    %p137 = scmp.eq.s32.totalorder %s17, 1
    %p138 = por %p136, %p137
    %p140 = scmp.ne.s32.totalorder %s125, %s139
    %p141 = scmp.eq.s32.totalorder %s17, 0
    %p142 = por %p140, %p141
    %s143 = ssub.s32 %s18, %s30
    %p144 = scmp.eq.s32.totalorder %s143, 0
    %s146 = sadd.s32 %s145, 1
    %s147 = scalar_select %p144, %s145, %s146
    %p150 = pneg %p144
    %p151 = scmp.eq.s32.totalorder %s11, 1
    %p152 = por %p150, %p151
    %p153 = scmp.ne.s32.totalorder %s145, %s148
    %p154 = scmp.eq.s32.totalorder %s11, 0
    %p155 = por %p153, %p154
    %p156 = scmp.ne.s32.totalorder %s145, %s148
    %p157 = scmp.eq.s32.totalorder %s16, 1
    %p158 = por %p156, %p157
    %p159 = scmp.ne.s32.totalorder %s148, %s149
    %p160 = scmp.eq.s32.totalorder %s16, 0
    %p161 = por %p159, %p160
    %p162 = scmp.ne.s32.totalorder %s148, %s149
    %p163 = scmp.eq.s32.totalorder %s17, 1
    %p164 = por %p162, %p163
    %p166 = scmp.ne.s32.totalorder %s149, %s165
    %p167 = scmp.eq.s32.totalorder %s17, 0
    %p168 = por %p166, %p167
    %p169 = scmp.le.s32.totalorder 1, %s11
    %p170 = scmp.lt.s32.totalorder %s11, 3
    %p171 = pnand %p169, %p170
    %p172 = pneg %p171
    // Predicated region
    $region9: #{camera_props_forward.1} parent=5 // pred_check
      _
    $region10: #{camera_props_forward.1} parent=5 // pred_check_branch
      %174 = sbr.rel (%p171) target = $region12
    $region11: #{camera_props_forward.1} parent=5 // pred_region
      %s175 = ssub.s32 %s11, 1
      // Predicated region
      $region13: #{camera_props_forward.1} parent=11 // pred_check
        %p176 = pneg %p72
      $region14: #{camera_props_forward.1} parent=11 // pred_check_branch
        %178 = sbr.rel (%p176) target = $region16
      $region15: #{camera_props_forward.1} parent=11 // pred_region
        _
      $region16: #{camera_props_forward.1} parent=11 // pred_fallthru
        _
      // Predicated region
      $region17: #{camera_props_forward.1} parent=11 // pred_check
        %p179 = pneg %p93
      $region18: #{camera_props_forward.1} parent=11 // pred_check_branch
        %181 = sbr.rel (%p179) target = $region20
      $region19: #{camera_props_forward.1} parent=11 // pred_region
        _
      $region20: #{camera_props_forward.1} parent=11 // pred_fallthru
        _
      // Predicated region
      $region21: #{camera_props_forward.1} parent=11 // pred_check
        %p182 = pneg %p114
      $region22: #{camera_props_forward.1} parent=11 // pred_check_branch
        %184 = sbr.rel (%p182) target = $region24
      $region23: #{camera_props_forward.1} parent=11 // pred_region
        _
      $region24: #{camera_props_forward.1} parent=11 // pred_fallthru
        _
      // Predicated region
      $region25: #{camera_props_forward.1} parent=11 // pred_check
        %p185 = pneg %p135
      $region26: #{camera_props_forward.1} parent=11 // pred_check_branch
        %187 = sbr.rel (%p185) target = $region28
      $region27: #{camera_props_forward.1} parent=11 // pred_region
        _
      $region28: #{camera_props_forward.1} parent=11 // pred_fallthru
        _
    $region12: #{camera_props_forward.1} parent=5 // pred_fallthru
      _
    %p188 = scmp.lt.s32.totalorder %s11, 2
    // Predicated region
    $region29: #{camera_props_forward.1} parent=5 // pred_check
      %p189 = pneg %p188
    $region30: #{camera_props_forward.1} parent=5 // pred_check_branch
      %191 = sbr.rel (%p189) target = $region32
    $region31: #{camera_props_forward.1} parent=5 // pred_region
      // Predicated region
      $region33: #{camera_props_forward.1} parent=31 // pred_check
        %p192 = pneg %p45
      $region34: #{camera_props_forward.1} parent=31 // pred_check_branch
        %194 = sbr.rel (%p192) target = $region36
      $region35: #{camera_props_forward.1} parent=31 // pred_region
        %s195 = smul.u32 25, %s19
        %p196 = scmp.lt.s32.totalorder %s18, 1
        %s197 = scalar_select %p196, %s18, 1
        %p198 = scmp.lt.s32.totalorder %s195, 24
        %s199 = scalar_select %p198, %s195, 24
        %s200 = smul.addr %s197, 25
        %s201 = sadd.s32 %s199, %s200
        %s202 = smul.addr %s201, 4
        %s203 = scalar_lea.vmem %s0, %s202
        %s204 = smul.u32 25, %s19
      $region36: #{camera_props_forward.1} parent=31 // pred_fallthru
        _
    $region32: #{camera_props_forward.1} parent=5 // pred_fallthru
      _
    %p205 = scmp.le.s32.totalorder 1, %s11
    %p206 = scmp.lt.s32.totalorder %s11, 3
    %p207 = pnand %p205, %p206
    %p208 = pneg %p207
    // Predicated region
    $region37: #{camera_props_forward.1} parent=5 // pred_check
      _
    $region38: #{camera_props_forward.1} parent=5 // pred_check_branch
      %210 = sbr.rel (%p207) target = $region40
    $region39: #{camera_props_forward.1} parent=5 // pred_region
      %s211 = ssub.s32 %s11, 1
      %s212 = smul.u32 25, %s21
      %p213 = scmp.lt.s32.totalorder %s20, 1
      %s214 = scalar_select %p213, %s20, 1
      %p215 = scmp.lt.s32.totalorder %s212, 24
      %s216 = scalar_select %p215, %s212, 24
      %s217 = smul.addr %s214, 25
      %s218 = sadd.s32 %s216, %s217
      %s219 = smul.addr %s218, 4
      %s220 = scalar_lea.vmem %s0, %s219
      %p221 = pneg %p51
      %p222 = pneg %p48
      %p223 = pneg %p72
      %p224 = pneg %p69
      %p225 = pneg %p93
      %p226 = pneg %p90
      %p227 = pneg %p114
      %p228 = pneg %p111
      %p229 = pneg %p135
      %p230 = pneg %p132
      %p231 = pneg %p161
      %p232 = pneg %p158
      %p233 = scmp.lt.s32.totalorder %s20, 1
      %s234 = scalar_select %p233, %s20, 1
      %s235 = scalar_lea.vmem %s5, %s234
      %s236 = smul.u32 25, %s21
      %p237 = scmp.lt.s32.totalorder %s20, 1
      %s238 = scalar_select %p237, %s20, 1
      %p239 = scmp.lt.s32.totalorder %s236, 24
      %s240 = scalar_select %p239, %s236, 24
      %s241 = smul.addr %s238, 25
      %s242 = sadd.s32 %s240, %s241
      %s243 = smul.addr %s242, 4
      %s244 = scalar_lea.vmem %s0, %s243
      %s245 = smul.u32 25, %s21
      %p246 = scmp.lt.s32.totalorder %s20, 1
      %s247 = scalar_select %p246, %s20, 1
      %s248 = scalar_lea.vmem %s5, %s247
      %p250 = scmp.eq.s32.totalorder %s21, 0
      // Predicated region
      $region41: #{camera_props_forward.1} parent=39 // pred_check
        %p251 = pneg %p250
      $region42: #{camera_props_forward.1} parent=39 // pred_check_branch
        %253 = sbr.rel (%p251) target = $region44
      $region43: #{camera_props_forward.1} parent=39 // pred_region
        %254 = vst [vmem:[#allocation2] sm:$0x1] 0.0
      $region44: #{camera_props_forward.1} parent=39 // pred_fallthru
        _
      %v255 = vld [vmem:[%s244] sm:$0xf]
      %v256 = vld [vmem:[%s244 + $0x4] sm:$0xf]
      %v257 = vld [vmem:[%s244 + $0x8] sm:$0xf]
      %v258 = vld [vmem:[%s244 + $0xc] sm:$0xf]
      %v259 = vld [vmem:[%s244 + $0x10] sm:$0xf]
      %v260 = vld [vmem:[%s244 + $0x14] sm:$0xf]
      %v261 = vld [vmem:[%s244 + $0x18] sm:$0xf]
      %v262 = vld [vmem:[%s244 + $0x1c] sm:$0xf]
      %v263 = vld [vmem:[%s244 + $0x20] sm:$0xf]
      %v264 = vld [vmem:[%s244 + $0x24] sm:$0xf]
      %v265 = vld [vmem:[%s244 + $0x28] sm:$0xf]
      %v266 = vld [vmem:[%s244 + $0x2c] sm:$0xf]
      %v267 = vld [vmem:[%s244 + $0x30] sm:$0xf]
      %v268 = vld [vmem:[%s244 + $0x34] sm:$0xf]
      %v269 = vld [vmem:[%s244 + $0x38] sm:$0xf]
      %v270 = vld [vmem:[%s244 + $0x3c] sm:$0xf]
      %v271 = vld [vmem:[%s244 + $0x40] sm:$0xf]
      %v272 = vld [vmem:[%s244 + $0x44] sm:$0xf]
      %v273 = vld [vmem:[%s244 + $0x48] sm:$0xf]
      %v274 = vld [vmem:[%s244 + $0x4c] sm:$0xf]
      %v275 = vld [vmem:[%s244 + $0x50] sm:$0xf]
      %v276 = vld [vmem:[%s244 + $0x54] sm:$0xf]
      %v277 = vld [vmem:[%s244 + $0x58] sm:$0xf]
      %v278 = vld [vmem:[%s244 + $0x5c] sm:$0xf]
      %v279 = vld [vmem:[%s244 + $0x60] sm:$0xf]
      %v280 = vld [vmem:[%s1] sm:$0xf]
      %v281 = vld [vmem:[%s1 + $0x4] sm:$0xf]
      %v282 = vld [vmem:[%s1 + $0x8] sm:$0xf]
      %v283 = vld [vmem:[%s1 + $0xc] sm:$0xf]
      %v284 = vld [vmem:[%s1 + $0x10] sm:$0x3]
      %v285 = vld [vmem:[%s4] sm:$0x1]
      %v286 = vlaneseq
      %v287 = vshrl.u32 %v286, 7
      %v288 = vsub.s32 0, %v287
      %v289 = vrot.slane %v285, %v288
      %v315 = vunpack.c.l.b16 %v255
      %v316 = vunpack.c.l.b16 %v256
      %v317 = vunpack.c.l.b16 %v257
      %v318 = vunpack.c.l.b16 %v258
      %v319 = vunpack.c.l.b16 %v259
      %v320 = vunpack.c.l.b16 %v260
      %v321 = vunpack.c.l.b16 %v261
      %v322 = vunpack.c.l.b16 %v262
      %v323 = vunpack.c.l.b16 %v263
      %v324 = vunpack.c.l.b16 %v264
      %v325 = vunpack.c.l.b16 %v265
      %v326 = vunpack.c.l.b16 %v266
      %v327 = vunpack.c.l.b16 %v267
      %v328 = vunpack.c.l.b16 %v268
      %v329 = vunpack.c.l.b16 %v269
      %v330 = vunpack.c.l.b16 %v270
      %v331 = vunpack.c.l.b16 %v271
      %v332 = vunpack.c.l.b16 %v272
      %v333 = vunpack.c.l.b16 %v273
      %v334 = vunpack.c.l.b16 %v274
      %v335 = vunpack.c.l.b16 %v275
      %v336 = vunpack.c.l.b16 %v276
      %v337 = vunpack.c.l.b16 %v277
      %v338 = vunpack.c.l.b16 %v278
      %v339 = vunpack.c.l.b16 %v279
      %v340 = vpack.c.b16 %v316, %v315
      %v341 = vpack.c.b16 %v318, %v317
      %v342 = vpack.c.b16 %v320, %v319
      %v343 = vpack.c.b16 %v322, %v321
      %v344 = vpack.c.b16 %v324, %v323
      %v345 = vpack.c.b16 %v326, %v325
      %v346 = vpack.c.b16 %v328, %v327
      %v347 = vpack.c.b16 %v330, %v329
      %v348 = vpack.c.b16 %v332, %v331
      %v349 = vpack.c.b16 %v334, %v333
      %v350 = vpack.c.b16 %v336, %v335
      %v351 = vpack.c.b16 %v338, %v337
      %v352 = vpack.c.b16 %v339, %v339
      %v358 = vunpack.c.l.b16 %v280
      %v359 = vunpack.c.l.b16 %v281
      %v360 = vunpack.c.l.b16 %v282
      %v361 = vunpack.c.l.b16 %v283
      %v362 = vunpack.c.l.b16 %v284
      %v363 = vpack.c.b16 %v359, %v358
      %v364 = vpack.c.b16 %v361, %v360
      %v365 = vpack.c.b16 %v362, %v362
      %vm368 = vcmask 293888
      %v370 = vsel %vm368, %v340, 0
      %v373 = vsel %vm368, %v341, 0
      %v376 = vsel %vm368, %v342, 0
      %v379 = vsel %vm368, %v343, 0
      %v382 = vsel %vm368, %v344, 0
      %v385 = vsel %vm368, %v345, 0
      %v388 = vsel %vm368, %v346, 0
      %v391 = vsel %vm368, %v347, 0
      %v394 = vsel %vm368, %v348, 0
      %v397 = vsel %vm368, %v349, 0
      %v400 = vsel %vm368, %v350, 0
      %v403 = vsel %vm368, %v351, 0
      %v406 = vsel %vm368, %v352, 0
      %vm408 = vcmask 1041408
      %v410 = vsel %vm408, %v365, 0
      %412 = vmatprep.subr.bf16.mxu0 0
      %413 = vmatpush1.bf16.msra.mxu0 %v363
      %414 = vmatprep.subr.bf16.mxu0 0
      %415 = vmatpush1.bf16.msra.mxu0 %v364
      %416 = vmatprep.subr.bf16.mxu0 0
      %417 = vmatpush1.bf16.msra.mxu0 %v410
      %418 = vmatprep.subr.bf16.mxu0 0
      %419 = vmatpush1.bf16.msra.mxu0 0
      %420 = vmatprep.subr.bf16.mxu0 0
      %421 = vmatpush1.bf16.msra.mxu0 0
      %422 = vmatprep.subr.bf16.mxu0 0
      %423 = vmatpush1.bf16.msra.mxu0 0
      %424 = vmatprep.subr.bf16.mxu0 0
      %425 = vmatpush1.bf16.msra.mxu0 0
      %426 = vmatprep.subr.bf16.mxu0 0
      %427 = vmatpush1.bf16.msra.mxu0 0
      %428 = vmatprep.subr.bf16.mxu0 0
      %429 = vmatpush1.bf16.msra.mxu0 0
      %430 = vmatprep.subr.bf16.mxu0 0
      %431 = vmatpush1.bf16.msra.mxu0 0
      %432 = vmatprep.subr.bf16.mxu0 0
      %433 = vmatpush1.bf16.msra.mxu0 0
      %434 = vmatprep.subr.bf16.mxu0 0
      %435 = vmatpush1.bf16.msra.mxu0 0
      %436 = vmatprep.subr.bf16.mxu0 0
      %437 = vmatpush1.bf16.msra.mxu0 0
      %438 = vmatprep.subr.bf16.mxu0 0
      %439 = vmatpush1.bf16.msra.mxu0 0
      %440 = vmatprep.subr.bf16.mxu0 0
      %441 = vmatpush1.bf16.msra.mxu0 0
      %442 = vmatprep.subr.bf16.mxu0 0
      %443 = vmatpush1.bf16.msra.mxu0 0
      %444 = vmatprep.mubr.bf16.mxu0 0
      %445 = vmatmul.mubr.bf16.gmra.mrb[0].mxu0 %v370
      %v446 = vpop.f32.mrb[0].mxu0
      %v447 = vadd.f32 %v289, %v446
      %v448 = vpop.f32.mrb[0].mxu0
      %v449 = vpop.f32.mrb[0].mxu0
      %v450 = vadd.f32 %v289, %v449
      %v451 = vpop.f32.mrb[0].mxu0
      %452 = vmatprep.mubr.bf16.mxu0 0
      %453 = vmatmul.mubr.bf16.gmra.mrb[0].mxu0 %v373
      %v454 = vpop.f32.mrb[0].mxu0
      %v455 = vadd.f32 %v289, %v454
      %v456 = vpop.f32.mrb[0].mxu0
      %v457 = vpop.f32.mrb[0].mxu0
      %v458 = vadd.f32 %v289, %v457
      %v459 = vpop.f32.mrb[0].mxu0
      %460 = vmatprep.mubr.bf16.mxu0 0
      %461 = vmatmul.mubr.bf16.gmra.mrb[0].mxu0 %v376
      %v462 = vpop.f32.mrb[0].mxu0
      %v463 = vadd.f32 %v289, %v462
      %v464 = vpop.f32.mrb[0].mxu0
      %v465 = vpop.f32.mrb[0].mxu0
      %v466 = vadd.f32 %v289, %v465
      %v467 = vpop.f32.mrb[0].mxu0
      %468 = vmatprep.mubr.bf16.mxu0 0
      %469 = vmatmul.mubr.bf16.gmra.mrb[0].mxu0 %v379
      %v470 = vpop.f32.mrb[0].mxu0
      %v471 = vadd.f32 %v289, %v470
      %v472 = vpop.f32.mrb[0].mxu0
      %v473 = vpop.f32.mrb[0].mxu0
      %v474 = vadd.f32 %v289, %v473
      %v475 = vpop.f32.mrb[0].mxu0
      %476 = vmatprep.mubr.bf16.mxu0 0
      %477 = vmatmul.mubr.bf16.gmra.mrb[0].mxu0 %v382
      %v478 = vpop.f32.mrb[0].mxu0
      %v479 = vadd.f32 %v289, %v478
      %v480 = vpop.f32.mrb[0].mxu0
      %v481 = vpop.f32.mrb[0].mxu0
      %v482 = vadd.f32 %v289, %v481
      %v483 = vpop.f32.mrb[0].mxu0
      %484 = vmatprep.mubr.bf16.mxu0 0
      %485 = vmatmul.mubr.bf16.gmra.mrb[0].mxu0 %v385
      %v486 = vpop.f32.mrb[0].mxu0
      %v487 = vadd.f32 %v289, %v486
      %v488 = vpop.f32.mrb[0].mxu0
      %v489 = vpop.f32.mrb[0].mxu0
      %v490 = vadd.f32 %v289, %v489
      %v491 = vpop.f32.mrb[0].mxu0
      %492 = vmatprep.mubr.bf16.mxu0 0
      %493 = vmatmul.mubr.bf16.gmra.mrb[0].mxu0 %v388
      %v494 = vpop.f32.mrb[0].mxu0
      %v495 = vadd.f32 %v289, %v494
      %v496 = vpop.f32.mrb[0].mxu0
      %v497 = vpop.f32.mrb[0].mxu0
      %v498 = vadd.f32 %v289, %v497
      %v499 = vpop.f32.mrb[0].mxu0
      %500 = vmatprep.mubr.bf16.mxu0 0
      %501 = vmatmul.mubr.bf16.gmra.mrb[0].mxu0 %v391
      %v502 = vpop.f32.mrb[0].mxu0
      %v503 = vadd.f32 %v289, %v502
      %v504 = vpop.f32.mrb[0].mxu0
      %v505 = vpop.f32.mrb[0].mxu0
      %v506 = vadd.f32 %v289, %v505
      %v507 = vpop.f32.mrb[0].mxu0
      %508 = vmatprep.mubr.bf16.mxu0 0
      %509 = vmatmul.mubr.bf16.gmra.mrb[0].mxu0 %v394
      %v510 = vpop.f32.mrb[0].mxu0
      %v511 = vadd.f32 %v289, %v510
      %v512 = vpop.f32.mrb[0].mxu0
      %v513 = vpop.f32.mrb[0].mxu0
      %v514 = vadd.f32 %v289, %v513
      %v515 = vpop.f32.mrb[0].mxu0
      %516 = vmatprep.mubr.bf16.mxu0 0
      %517 = vmatmul.mubr.bf16.gmra.mrb[0].mxu0 %v397
      %v518 = vpop.f32.mrb[0].mxu0
      %v519 = vadd.f32 %v289, %v518
      %v520 = vpop.f32.mrb[0].mxu0
      %v521 = vpop.f32.mrb[0].mxu0
      %v522 = vadd.f32 %v289, %v521
      %v523 = vpop.f32.mrb[0].mxu0
      %524 = vmatprep.mubr.bf16.mxu0 0
      %525 = vmatmul.mubr.bf16.gmra.mrb[0].mxu0 %v400
      %v526 = vpop.f32.mrb[0].mxu0
      %v527 = vadd.f32 %v289, %v526
      %v528 = vpop.f32.mrb[0].mxu0
      %v529 = vpop.f32.mrb[0].mxu0
      %v530 = vadd.f32 %v289, %v529
      %v531 = vpop.f32.mrb[0].mxu0
      %532 = vmatprep.mubr.bf16.mxu0 0
      %533 = vmatmul.mubr.bf16.gmra.mrb[0].mxu0 %v403
      %v534 = vpop.f32.mrb[0].mxu0
      %v535 = vadd.f32 %v289, %v534
      %v536 = vpop.f32.mrb[0].mxu0
      %v537 = vpop.f32.mrb[0].mxu0
      %v538 = vadd.f32 %v289, %v537
      %v539 = vpop.f32.mrb[0].mxu0
      %540 = vmatprep.mubr.bf16.mxu0 0
      %541 = vmatmul.mubr.bf16.gmra.mrb[0].mxu0 %v406
      %v542 = vpop.f32.mrb[0].mxu0
      %v543 = vadd.f32 %v289, %v542
      %v544 = vpop.f32.mrb[0].mxu0
      %v545 = vpop.f32.mrb[0].mxu0
      %v546 = vpop.f32.mrb[0].mxu0
      %547 = vdwg.mxu0
      %v548 = vmax.f32 %v447, 0.0
      %v549 = vmax.f32 %v450, 0.0
      %v550 = vmax.f32 %v455, 0.0
      %v551 = vmax.f32 %v458, 0.0
      %v552 = vmax.f32 %v463, 0.0
      %v553 = vmax.f32 %v466, 0.0
      %v554 = vmax.f32 %v471, 0.0
      %v555 = vmax.f32 %v474, 0.0
      %v556 = vmax.f32 %v479, 0.0
      %v557 = vmax.f32 %v482, 0.0
      %v558 = vmax.f32 %v487, 0.0
      %v559 = vmax.f32 %v490, 0.0
      %v560 = vmax.f32 %v495, 0.0
      %v561 = vmax.f32 %v498, 0.0
      %v562 = vmax.f32 %v503, 0.0
      %v563 = vmax.f32 %v506, 0.0
      %v564 = vmax.f32 %v511, 0.0
      %v565 = vmax.f32 %v514, 0.0
      %v566 = vmax.f32 %v519, 0.0
      %v567 = vmax.f32 %v522, 0.0
      %v568 = vmax.f32 %v527, 0.0
      %v569 = vmax.f32 %v530, 0.0
      %v570 = vmax.f32 %v535, 0.0
      %v571 = vmax.f32 %v538, 0.0
      %v572 = vmax.f32 %v543, 0.0
      %v573 = vlaneseq
      %v574 = vshrl.u32 %v573, 7
      %v575 = vadd.s32 %v574, 8
      %v576 = vadd.s32 %v574, 16
      %v577 = vadd.s32 %v574, 24
      %v578 = vadd.s32 %v574, 32
      %v579 = vadd.s32 %v574, 40
      %v580 = vadd.s32 %v574, 48
      %v581 = vadd.s32 %v574, 56
      %v582 = vadd.s32 %v574, 64
      %v583 = vadd.s32 %v574, 72
      %v584 = vadd.s32 %v574, 80
      %v585 = vadd.s32 %v574, 88
      %v586 = vadd.s32 %v574, 96
      %v587 = vadd.s32 %v574, 104
      %v588 = vadd.s32 %v574, 112
      %v589 = vadd.s32 %v574, 120
      %v590 = vadd.s32 %v574, 128
      %v591 = vadd.s32 %v574, 136
      %v592 = vadd.s32 %v574, 144
      %v593 = vadd.s32 %v574, 152
      %v594 = vadd.s32 %v574, 160
      %v595 = vadd.s32 %v574, 168
      %v596 = vadd.s32 %v574, 176
      %v597 = vadd.s32 %v574, 184
      %v598 = vadd.s32 %v574, 192
      %s599 = smul.u32 %s21, 200
      %v600 = vstv %s599
      %v601 = vadd.s32 %v574, %v600
      %v602 = vadd.s32 %v575, %v600
      %v603 = vadd.s32 %v576, %v600
      %v604 = vadd.s32 %v577, %v600
      %v605 = vadd.s32 %v578, %v600
      %v606 = vadd.s32 %v579, %v600
      %v607 = vadd.s32 %v580, %v600
      %v608 = vadd.s32 %v581, %v600
      %v609 = vadd.s32 %v582, %v600
      %v610 = vadd.s32 %v583, %v600
      %v611 = vadd.s32 %v584, %v600
      %v612 = vadd.s32 %v585, %v600
      %v613 = vadd.s32 %v586, %v600
      %v614 = vadd.s32 %v587, %v600
      %v615 = vadd.s32 %v588, %v600
      %v616 = vadd.s32 %v589, %v600
      %v617 = vadd.s32 %v590, %v600
      %v618 = vadd.s32 %v591, %v600
      %v619 = vadd.s32 %v592, %v600
      %v620 = vadd.s32 %v593, %v600
      %v621 = vadd.s32 %v594, %v600
      %v622 = vadd.s32 %v595, %v600
      %v623 = vadd.s32 %v596, %v600
      %v624 = vadd.s32 %v597, %v600
      %v625 = vadd.s32 %v598, %v600
      %vm626 = vcmp.lt.s32.totalorder %v601, 196
      %vm627 = vcmp.lt.s32.totalorder %v602, 196
      %vm628 = vcmp.lt.s32.totalorder %v603, 196
      %vm629 = vcmp.lt.s32.totalorder %v604, 196
      %vm630 = vcmp.lt.s32.totalorder %v605, 196
      %vm631 = vcmp.lt.s32.totalorder %v606, 196
      %vm632 = vcmp.lt.s32.totalorder %v607, 196
      %vm633 = vcmp.lt.s32.totalorder %v608, 196
      %vm634 = vcmp.lt.s32.totalorder %v609, 196
      %vm635 = vcmp.lt.s32.totalorder %v610, 196
      %vm636 = vcmp.lt.s32.totalorder %v611, 196
      %vm637 = vcmp.lt.s32.totalorder %v612, 196
      %vm638 = vcmp.lt.s32.totalorder %v613, 196
      %vm639 = vcmp.lt.s32.totalorder %v614, 196
      %vm640 = vcmp.lt.s32.totalorder %v615, 196
      %vm641 = vcmp.lt.s32.totalorder %v616, 196
      %vm642 = vcmp.lt.s32.totalorder %v617, 196
      %vm643 = vcmp.lt.s32.totalorder %v618, 196
      %vm644 = vcmp.lt.s32.totalorder %v619, 196
      %vm645 = vcmp.lt.s32.totalorder %v620, 196
      %vm646 = vcmp.lt.s32.totalorder %v621, 196
      %vm647 = vcmp.lt.s32.totalorder %v622, 196
      %vm648 = vcmp.lt.s32.totalorder %v623, 196
      %vm649 = vcmp.lt.s32.totalorder %v624, 196
      %vm650 = vcmp.lt.s32.totalorder %v625, 196
      %v651 = vsel %vm626, %v548, 0.0
      %v652 = vsel %vm627, %v549, 0.0
      %v653 = vsel %vm628, %v550, 0.0
      %v654 = vsel %vm629, %v551, 0.0
      %v655 = vsel %vm630, %v552, 0.0
      %v656 = vsel %vm631, %v553, 0.0
      %v657 = vsel %vm632, %v554, 0.0
      %v658 = vsel %vm633, %v555, 0.0
      %v659 = vsel %vm634, %v556, 0.0
      %v660 = vsel %vm635, %v557, 0.0
      %v661 = vsel %vm636, %v558, 0.0
      %v662 = vsel %vm637, %v559, 0.0
      %v663 = vsel %vm638, %v560, 0.0
      %v664 = vsel %vm639, %v561, 0.0
      %v665 = vsel %vm640, %v562, 0.0
      %v666 = vsel %vm641, %v563, 0.0
      %v667 = vsel %vm642, %v564, 0.0
      %v668 = vsel %vm643, %v565, 0.0
      %v669 = vsel %vm644, %v566, 0.0
      %v670 = vsel %vm645, %v567, 0.0
      %v671 = vsel %vm646, %v568, 0.0
      %v672 = vsel %vm647, %v569, 0.0
      %v673 = vsel %vm648, %v570, 0.0
      %v674 = vsel %vm649, %v571, 0.0
      %v675 = vsel %vm650, %v572, 0.0
      %v676 = vld [vmem:[#allocation2] sm:$0x1]
      %v677 = vadd.f32 %v651, %v652
      %v678 = vadd.f32 %v677, %v653
      %v679 = vadd.f32 %v678, %v654
      %v680 = vadd.f32 %v679, %v655
      %v681 = vadd.f32 %v680, %v656
      %v682 = vadd.f32 %v681, %v657
      %v683 = vadd.f32 %v682, %v658
      %v684 = vadd.f32 %v683, %v659
      %v685 = vadd.f32 %v684, %v660
      %v686 = vadd.f32 %v685, %v661
      %v687 = vadd.f32 %v686, %v662
      %v688 = vadd.f32 %v687, %v663
      %v689 = vadd.f32 %v688, %v664
      %v690 = vadd.f32 %v689, %v665
      %v691 = vadd.f32 %v690, %v666
      %v692 = vadd.f32 %v691, %v667
      %v693 = vadd.f32 %v692, %v668
      %v694 = vadd.f32 %v693, %v669
      %v695 = vadd.f32 %v694, %v670
      %v696 = vadd.f32 %v695, %v671
      %v697 = vadd.f32 %v696, %v672
      %v698 = vadd.f32 %v697, %v673
      %v699 = vadd.f32 %v698, %v674
      %v700 = vadd.f32 %v699, %v675
      %v701 = vrot.slane %v700, 4
      %v702 = vadd.f32 %v700, %v701
      %v703 = vrot.slane %v702, 2
      %v704 = vadd.f32 %v702, %v703
      %v705 = vrot.slane %v704, 1
      %v706 = vadd.f32 %v704, %v705
      %v707 = vadd.f32 %v676, %v706
      %708 = vst [vmem:[#allocation2] sm:$0x1] %v707
      // Predicated region
      $region45: #{camera_props_forward.1} parent=39 // pred_check
        %p709 = pneg %p250
      $region46: #{camera_props_forward.1} parent=39 // pred_check_branch
        %711 = sbr.rel (%p709) target = $region48
      $region47: #{camera_props_forward.1} parent=39 // pred_region
        %v712 = vld [vmem:[#allocation2] sm:$0x1]
        %v713 = vmul.f32 %v712, 0.0051020407
        %v714 = vld [vmem:[%s4 + $0x1] sm:$0x1]
        %v715 = vld [vmem:[%s2] sm:$0xff]
        %v716 = vld [vmem:[%s2 + $0x8] sm:$0xff]
        %v717 = vld [vmem:[%s2 + $0x10] sm:$0xff]
        %v718 = vld [vmem:[%s2 + $0x18] sm:$0xff]
        %v719 = vld [vmem:[%s2 + $0x20] sm:$0xff]
        %v720 = vld [vmem:[%s2 + $0x28] sm:$0xff]
        %v721 = vld [vmem:[%s2 + $0x30] sm:$0xff]
        %v722 = vld [vmem:[%s2 + $0x38] sm:$0xff]
        %v723 = vld [vmem:[%s2 + $0x40] sm:$0xff]
        %v724 = vld [vmem:[%s2 + $0x48] sm:$0xff]
        %v725 = vld [vmem:[%s2 + $0x50] sm:$0xff]
        %v726 = vld [vmem:[%s2 + $0x58] sm:$0xff]
        %v727 = vld [vmem:[%s2 + $0x60] sm:$0xff]
        %v728 = vld [vmem:[%s2 + $0x68] sm:$0xff]
        %v729 = vld [vmem:[%s2 + $0x70] sm:$0xff]
        %v730 = vld [vmem:[%s2 + $0x78] sm:$0xff]
        %731 = vmatprep.subr.mxu0 0.0
        %732 = vmatpush1.msra.mxu0 %v715
        %733 = vmatprep.subr.mxu0 0.0
        %734 = vmatpush1.msra.mxu0 %v716
        %735 = vmatprep.subr.mxu0 0.0
        %736 = vmatpush1.msra.mxu0 %v717
        %737 = vmatprep.subr.mxu0 0.0
        %738 = vmatpush1.msra.mxu0 %v718
        %739 = vmatprep.subr.mxu0 0.0
        %740 = vmatpush1.msra.mxu0 %v719
        %741 = vmatprep.subr.mxu0 0.0
        %742 = vmatpush1.msra.mxu0 %v720
        %743 = vmatprep.subr.mxu0 0.0
        %744 = vmatpush1.msra.mxu0 %v721
        %745 = vmatprep.subr.mxu0 0.0
        %746 = vmatpush1.msra.mxu0 %v722
        %747 = vmatprep.subr.mxu0 0.0
        %748 = vmatpush1.msra.mxu0 %v723
        %749 = vmatprep.subr.mxu0 0.0
        %750 = vmatpush1.msra.mxu0 %v724
        %751 = vmatprep.subr.mxu0 0.0
        %752 = vmatpush1.msra.mxu0 %v725
        %753 = vmatprep.subr.mxu0 0.0
        %754 = vmatpush1.msra.mxu0 %v726
        %755 = vmatprep.subr.mxu0 0.0
        %756 = vmatpush1.msra.mxu0 %v727
        %757 = vmatprep.subr.mxu0 0.0
        %758 = vmatpush1.msra.mxu0 %v728
        %759 = vmatprep.subr.mxu0 0.0
        %760 = vmatpush1.msra.mxu0 %v729
        %761 = vmatprep.subr.mxu0 0.0
        %762 = vmatpush1.msra.mxu0 %v730
        %763 = vmatprep.subr.mxu0 0.0
        %764 = vmatpush1.msra.mxu0 0.0
        %765 = vmatprep.subr.mxu0 0.0
        %766 = vmatpush1.msra.mxu0 0.0
        %767 = vmatprep.subr.mxu0 0.0
        %768 = vmatpush1.msra.mxu0 0.0
        %769 = vmatprep.subr.mxu0 0.0
        %770 = vmatpush1.msra.mxu0 0.0
        %771 = vmatprep.subr.mxu0 0.0
        %772 = vmatpush1.msra.mxu0 0.0
        %773 = vmatprep.subr.mxu0 0.0
        %774 = vmatpush1.msra.mxu0 0.0
        %775 = vmatprep.subr.mxu0 0.0
        %776 = vmatpush1.msra.mxu0 0.0
        %777 = vmatprep.subr.mxu0 0.0
        %778 = vmatpush1.msra.mxu0 0.0
        %779 = vmatprep.subr.mxu0 0.0
        %780 = vmatpush1.msra.mxu0 0.0
        %781 = vmatprep.subr.mxu0 0.0
        %782 = vmatpush1.msra.mxu0 0.0
        %783 = vmatprep.subr.mxu0 0.0
        %784 = vmatpush1.msra.mxu0 0.0
        %785 = vmatprep.subr.mxu0 0.0
        %786 = vmatpush1.msra.mxu0 0.0
        %787 = vmatprep.subr.mxu0 0.0
        %788 = vmatpush1.msra.mxu0 0.0
        %789 = vmatprep.subr.mxu0 0.0
        %790 = vmatpush1.msra.mxu0 0.0
        %791 = vmatprep.subr.mxu0 0.0
        %792 = vmatpush1.msra.mxu0 0.0
        %793 = vmatprep.subr.mxu0 0.0
        %794 = vmatpush1.msra.mxu0 0.0
        %795 = vmatprep.mubr.f32.mxu0 0.0
        %796 = vmatmul.mubr.f32.gmra.mrb[0].mxu0 %v713
        %v797 = vpop.f32.mrb[0].mxu0
        %v798 = vadd.f32 %v714, %v797
        %v799 = vpop.f32.mrb[0].mxu0
        %800 = vdwg.mxu0
        %v801 = vmax.f32 %v798, 0.0
        %v802 = vld [vmem:[%s4 + $0x2] sm:$0x1]
        %v803 = vld [vmem:[%s3] sm:$0xff]
        %v804 = vld [vmem:[%s3 + $0x8] sm:$0xff]
        %v805 = vld [vmem:[%s3 + $0x10] sm:$0xff]
        %v806 = vld [vmem:[%s3 + $0x18] sm:$0xff]
        %vm807 = vcmask 261120
        %v809 = vsel %vm807, %v801, 0
        %811 = vmatprep.subr.mxu0 0.0
        %812 = vmatpush1.msra.mxu0 %v803
        %813 = vmatprep.subr.mxu0 0.0
        %814 = vmatpush1.msra.mxu0 %v804
        %815 = vmatprep.subr.mxu0 0.0
        %816 = vmatpush1.msra.mxu0 %v805
        %817 = vmatprep.subr.mxu0 0.0
        %818 = vmatpush1.msra.mxu0 %v806
        %819 = vmatprep.subr.mxu0 0.0
        %820 = vmatpush1.msra.mxu0 0.0
        %821 = vmatprep.subr.mxu0 0.0
        %822 = vmatpush1.msra.mxu0 0.0
        %823 = vmatprep.subr.mxu0 0.0
        %824 = vmatpush1.msra.mxu0 0.0
        %825 = vmatprep.subr.mxu0 0.0
        %826 = vmatpush1.msra.mxu0 0.0
        %827 = vmatprep.subr.mxu0 0.0
        %828 = vmatpush1.msra.mxu0 0.0
        %829 = vmatprep.subr.mxu0 0.0
        %830 = vmatpush1.msra.mxu0 0.0
        %831 = vmatprep.subr.mxu0 0.0
        %832 = vmatpush1.msra.mxu0 0.0
        %833 = vmatprep.subr.mxu0 0.0
        %834 = vmatpush1.msra.mxu0 0.0
        %835 = vmatprep.subr.mxu0 0.0
        %836 = vmatpush1.msra.mxu0 0.0
        %837 = vmatprep.subr.mxu0 0.0
        %838 = vmatpush1.msra.mxu0 0.0
        %839 = vmatprep.subr.mxu0 0.0
        %840 = vmatpush1.msra.mxu0 0.0
        %841 = vmatprep.subr.mxu0 0.0
        %842 = vmatpush1.msra.mxu0 0.0
        %843 = vmatprep.subr.mxu0 0.0
        %844 = vmatpush1.msra.mxu0 0.0
        %845 = vmatprep.subr.mxu0 0.0
        %846 = vmatpush1.msra.mxu0 0.0
        %847 = vmatprep.subr.mxu0 0.0
        %848 = vmatpush1.msra.mxu0 0.0
        %849 = vmatprep.subr.mxu0 0.0
        %850 = vmatpush1.msra.mxu0 0.0
        %851 = vmatprep.subr.mxu0 0.0
        %852 = vmatpush1.msra.mxu0 0.0
        %853 = vmatprep.subr.mxu0 0.0
        %854 = vmatpush1.msra.mxu0 0.0
        %855 = vmatprep.subr.mxu0 0.0
        %856 = vmatpush1.msra.mxu0 0.0
        %857 = vmatprep.subr.mxu0 0.0
        %858 = vmatpush1.msra.mxu0 0.0
        %859 = vmatprep.subr.mxu0 0.0
        %860 = vmatpush1.msra.mxu0 0.0
        %861 = vmatprep.subr.mxu0 0.0
        %862 = vmatpush1.msra.mxu0 0.0
        %863 = vmatprep.subr.mxu0 0.0
        %864 = vmatpush1.msra.mxu0 0.0
        %865 = vmatprep.subr.mxu0 0.0
        %866 = vmatpush1.msra.mxu0 0.0
        %867 = vmatprep.subr.mxu0 0.0
        %868 = vmatpush1.msra.mxu0 0.0
        %869 = vmatprep.subr.mxu0 0.0
        %870 = vmatpush1.msra.mxu0 0.0
        %871 = vmatprep.subr.mxu0 0.0
        %872 = vmatpush1.msra.mxu0 0.0
        %873 = vmatprep.subr.mxu0 0.0
        %874 = vmatpush1.msra.mxu0 0.0
        %875 = vmatprep.mubr.f32.mxu0 0.0
        %876 = vmatmul.mubr.f32.gmra.mrb[0].mxu0 %v809
        %v877 = vpop.f32.mrb[0].mxu0
        %v878 = vadd.f32 %v802, %v877
        %v879 = vpop.f32.mrb[0].mxu0
        %880 = vdwg.mxu0
        %vm881 = vcmask 57344
        %882 = vst.msk [vmem:[%s248] sm:$0x1] %vm881, %v878
      $region48: #{camera_props_forward.1} parent=39 // pred_fallthru
        _
      %p883 = scmp.lt.s32.totalorder %s20, 1
      %s884 = scalar_select %p883, %s20, 1
      %s885 = scalar_lea.vmem %s5, %s884
      // Predicated region
      $region49: #{camera_props_forward.1} parent=39 // pred_check
        %p886 = pneg %p158
      $region50: #{camera_props_forward.1} parent=39 // pred_check_branch
        %888 = sbr.rel (%p886) target = $region52
      $region51: #{camera_props_forward.1} parent=39 // pred_region
        _
      $region52: #{camera_props_forward.1} parent=39 // pred_fallthru
        _
    $region40: #{camera_props_forward.1} parent=5 // pred_fallthru
      _
    %p889 = scmp.le.s32.totalorder 2, %s11
    // Predicated region
    $region53: #{camera_props_forward.1} parent=5 // pred_check
      %p890 = pneg %p889
    $region54: #{camera_props_forward.1} parent=5 // pred_check_branch
      %892 = sbr.rel (%p890) target = $region56
    $region55: #{camera_props_forward.1} parent=5 // pred_region
      %s893 = ssub.s32 %s11, 2
      // Predicated region
      $region57: #{camera_props_forward.1} parent=55 // pred_check
        %p894 = pneg %p164
      $region58: #{camera_props_forward.1} parent=55 // pred_check_branch
        %896 = sbr.rel (%p894) target = $region60
      $region59: #{camera_props_forward.1} parent=55 // pred_region
        %p897 = scmp.lt.s32.totalorder %s22, 1
        %s898 = scalar_select %p897, %s22, 1
        %s899 = scalar_lea.vmem %s5, %s898
      $region60: #{camera_props_forward.1} parent=55 // pred_fallthru
        _
    $region56: #{camera_props_forward.1} parent=5 // pred_fallthru
      _
  $region6: #{camera_props_forward.1} parent=0 // loop_footer
    %s15 = sadd.s32 1, %s11
  $region7: #{camera_props_forward.1} parent=0 // loop_footer_branch
    %10 = sbr.rel target = $region3
  $region8: #{camera_props_forward.1} parent=0 // loop_exit
    _

</llo_original>
